<compile_context>
chip_gen: v5e
topology: v5e:2x2
jax: 0.10.0
libtpu: 0.0.40
codegen_flags: <defaults>
</compile_context>

<pallas_src>
import functools

import jax
import jax.numpy as jnp
from jax.experimental import pallas as pl
from jax.experimental.pallas import tpu as pltpu


_LANE = 128        # lane width: feature/class dims padded to multiples of this
_SUBLANE = 8       # f32 sublane: batch tile padded to multiples of this
_NEG_BIG = -1e30   # bias pad value for the final layer (keeps padded classes
                   # out of the row-max / softmax sum)


def _round_up(v, m):
    return pl.cdiv(v, m) * m


# ---------------------------------------------------------------------------
# Fused kernel
# ---------------------------------------------------------------------------
def _fused_mlp_kernel(num_layers, matmul_dtype, x_ref, *refs):
    """Whole MLP for one batch tile: hidden ReLU layers + shifted softmax.

    refs = (w0, b0, w1, b1, ..., w_{L-1}, b_{L-1}, logits_ref, prob_ref).
    Intermediate activations stay in vregs/VMEM; nothing goes back to HBM
    between layers.
    """
    logits_ref = refs[2 * num_layers]
    prob_ref = refs[2 * num_layers + 1]

    y = x_ref[...]
    for li in range(num_layers):
        w = refs[2 * li][...]
        b = refs[2 * li + 1][...]
        # Optional bf16 operands (v6e/v7x MXU-native) with f32 accumulation;
        # bias add / activation stay in f32.
        y = jnp.dot(y.astype(matmul_dtype), w.astype(matmul_dtype),
                    preferred_element_type=jnp.float32)
        y = y + b
        if li != num_layers - 1:
            y = jnp.maximum(y, 0.0)

    # Final layer epilogue: subtract the row max, softmax over classes.
    # Padded class columns carry a -1e30 bias, so they never win the max and
    # their exp() underflows to 0 — the softmax over real classes is exact.
    y = y - jnp.max(y, axis=1, keepdims=True)
    logits_ref[...] = y
    e = jnp.exp(y)
    inv = pl.reciprocal(jnp.sum(e, axis=1, keepdims=True), approx=True)
    prob_ref[...] = e * inv


# ---------------------------------------------------------------------------
# Wrapper: padding, tiling, pallas_call
# ---------------------------------------------------------------------------
@functools.partial(jax.jit, static_argnames=("block_n", "matmul_dtype"))
def pt_deep_forward(x, weights, biases, block_n=None, matmul_dtype=jnp.float32):
    """Fused PTDeep forward. Returns (shifted_logits, prob), both [N, C]."""
    n, d_in = x.shape
    num_layers = len(weights)
    dims = [d_in] + [w.shape[1] for w in weights]
    pdims = [_round_up(d, _LANE) for d in dims]      # lane-dense feature dims
    n_classes = dims[-1]

    # Batch tiling: multiple-of-8 tile, capped so the double-buffered working
    # set (x tile + 2 output tiles, all 128 wide, x2 buffers) stays tiny even
    # on v7x's 64 MiB VMEM.
    n8 = _round_up(n, _SUBLANE)
    if block_n is None:
        block_n = min(n8, 512)
    block_n = _round_up(block_n, _SUBLANE)
    n_pad = _round_up(n8, block_n)

    # Zero-pad activations/weights; the final bias gets -1e30 in padded cols.
    x_p = jnp.pad(x.astype(jnp.float32),
                  ((0, n_pad - n), (0, pdims[0] - d_in)))
    params = []
    for li, (w, b) in enumerate(zip(weights, biases)):
        w_p = jnp.pad(w.astype(jnp.float32),
                      ((0, pdims[li] - w.shape[0]),
                       (0, pdims[li + 1] - w.shape[1])))
        fill = 0.0 if li != num_layers - 1 else _NEG_BIG
        b_p = jnp.pad(b.astype(jnp.float32),
                      ((0, 0), (0, pdims[li + 1] - b.shape[1])),
                      constant_values=fill)
        params += [w_p, b_p]

    grid = (n_pad // block_n,)
    in_specs = [pl.BlockSpec((block_n, pdims[0]), lambda i: (i, 0))]
    for li in range(num_layers):
        in_specs.append(
            pl.BlockSpec((pdims[li], pdims[li + 1]), lambda i: (0, 0)))
        in_specs.append(
            pl.BlockSpec((1, pdims[li + 1]), lambda i: (0, 0)))
    out_specs = (
        pl.BlockSpec((block_n, pdims[-1]), lambda i: (i, 0)),
        pl.BlockSpec((block_n, pdims[-1]), lambda i: (i, 0)),
    )
    out_shape = (
        jax.ShapeDtypeStruct((n_pad, pdims[-1]), jnp.float32),  # shifted logits
        jax.ShapeDtypeStruct((n_pad, pdims[-1]), jnp.float32),  # softmax probs
    )

    kernel = functools.partial(_fused_mlp_kernel, num_layers, matmul_dtype)
    logits_p, prob_p = pl.pallas_call(
        kernel,
        out_shape=out_shape,
        grid_spec=pltpu.PrefetchScalarGridSpec(
            num_scalar_prefetch=0,
            grid=grid,
            in_specs=in_specs,
            out_specs=out_specs,
        ),
        compiler_params=pltpu.CompilerParams(
            dimension_semantics=("parallel",)),
    )(x_p, *params)

    return logits_p[:n, :n_classes], prob_p[:n, :n_classes]


# ---------------------------------------------------------------------------
# Params + pure-JAX reference
# ---------------------------------------------------------------------------
def init_params(config, key):
    """torch.randn-style init for weights [d_in, d_out] and biases [1, d_out]."""
    weights, biases = [], []
    for i in range(len(config) - 1):
        key, kw, kb = jax.random.split(key, 3)
        weights.append(jax.random.normal(kw, (config[i], config[i + 1]),
                                         dtype=jnp.float32))
        biases.append(jax.random.normal(kb, (1, config[i + 1]),
                                        dtype=jnp.float32))
    return weights, biases


def pt_deep_forward_ref(x, weights, biases, matmul_dtype=jnp.float32):
    """Pure-JAX reference mirroring the PyTorch forward (same matmul dtype)."""
    y = x
    n_layers = len(weights)
    for i in range(n_layers):
        y = jnp.dot(y.astype(matmul_dtype), weights[i].astype(matmul_dtype),
                    preferred_element_type=jnp.float32) + biases[i]
        if i != n_layers - 1:
            y = jnp.maximum(y, 0.0)
    y = y - jnp.max(y, axis=1, keepdims=True)
    prob = jax.nn.softmax(y, axis=1)
    return y, prob


# ---------------------------------------------------------------------------
if __name__ == "__main__":
    # Small shapes consistent with the module: config = [D, H1, H2, C].
    config = [32, 64, 64, 16]
    batch = 50          # deliberately not a tile multiple: exercises padding

    key = jax.random.PRNGKey(0)
    key, kx = jax.random.split(key)
    x = jax.random.normal(kx, (batch, config[0]), dtype=jnp.float32)
    weights, biases = init_params(config, key)

    # f32-operand path, small tile so the grid has >1 step (pipelining / both
    # v7x TensorCores exercised).
    logits, prob = pt_deep_forward(x, weights, biases, block_n=32)
    jax.block_until_ready((logits, prob))
    logits_ref, prob_ref = pt_deep_forward_ref(x, weights, biases)
    assert logits.shape == (batch, config[-1])
    assert prob.shape == (batch, config[-1])
    assert jnp.allclose(logits, logits_ref, atol=1e-3, rtol=1e-3)
    assert jnp.allclose(prob, prob_ref, atol=5e-3, rtol=1e-2)
    assert jnp.allclose(jnp.sum(prob, axis=1), 1.0, atol=5e-3)

    # bf16-operand / f32-accumulate path (v6e/v7x MXU-native), checked against
    # a reference that uses the same matmul dtype.
    logits16, prob16 = pt_deep_forward(x, weights, biases, block_n=32,
                                       matmul_dtype=jnp.bfloat16)
    jax.block_until_ready((logits16, prob16))
    logits16_ref, prob16_ref = pt_deep_forward_ref(
        x, weights, biases, matmul_dtype=jnp.bfloat16)
    assert jnp.allclose(logits16, logits16_ref, atol=0.5, rtol=5e-2)
    assert jnp.allclose(prob16, prob16_ref, atol=2e-2, rtol=2e-1)
    assert jnp.allclose(jnp.sum(prob16, axis=1), 1.0, atol=5e-3)

    print("KERNEL_OK")
</pallas_src>

<mosaic_0001>
module attributes {stable_mosaic.version = 11 : i64} {
  func.func @_fused_mlp_kernel(%arg0: i32, %arg1: memref<32x128xf32, #tpu.memory_space<vmem>>, %arg2: memref<128x128xf32, #tpu.memory_space<vmem>>, %arg3: memref<1x128xf32, #tpu.memory_space<vmem>>, %arg4: memref<128x128xf32, #tpu.memory_space<vmem>>, %arg5: memref<1x128xf32, #tpu.memory_space<vmem>>, %arg6: memref<128x128xf32, #tpu.memory_space<vmem>>, %arg7: memref<1x128xf32, #tpu.memory_space<vmem>>, %arg8: memref<32x128xf32, #tpu.memory_space<vmem>>, %arg9: memref<32x128xf32, #tpu.memory_space<vmem>>) attributes {dimension_semantics = [#tpu.dimension_semantics<parallel>], iteration_bounds = array<i64: 2>, scalar_prefetch = 0 : i64, scratch_operands = 0 : i64, tpu.core_type = #tpu.core_type<tc>, window_params = [{transform_indices = @transform_0, window_bounds = array<i64: 32, 128>}, {pipeline_mode = #tpu.pipeline_mode<synchronous>, transform_indices = @transform_1, window_bounds = array<i64: 128, 128>}, {pipeline_mode = #tpu.pipeline_mode<synchronous>, transform_indices = @transform_2, window_bounds = array<i64: 1, 128>}, {pipeline_mode = #tpu.pipeline_mode<synchronous>, transform_indices = @transform_3, window_bounds = array<i64: 128, 128>}, {pipeline_mode = #tpu.pipeline_mode<synchronous>, transform_indices = @transform_4, window_bounds = array<i64: 1, 128>}, {pipeline_mode = #tpu.pipeline_mode<synchronous>, transform_indices = @transform_5, window_bounds = array<i64: 128, 128>}, {pipeline_mode = #tpu.pipeline_mode<synchronous>, transform_indices = @transform_6, window_bounds = array<i64: 1, 128>}, {transform_indices = @transform_7, window_bounds = array<i64: 32, 128>}, {transform_indices = @transform_8, window_bounds = array<i64: 32, 128>}]} {
    %c0 = arith.constant 0 : index
    %c0_0 = arith.constant 0 : index
    %0 = vector.load %arg1[%c0, %c0_0] : memref<32x128xf32, #tpu.memory_space<vmem>>, vector<32x128xf32>
    %c0_1 = arith.constant 0 : index
    %c0_2 = arith.constant 0 : index
    %1 = vector.load %arg2[%c0_1, %c0_2] : memref<128x128xf32, #tpu.memory_space<vmem>>, vector<128x128xf32>
    %c0_3 = arith.constant 0 : index
    %c0_4 = arith.constant 0 : index
    %2 = vector.load %arg3[%c0_3, %c0_4] : memref<1x128xf32, #tpu.memory_space<vmem>>, vector<1x128xf32>
    %cst = arith.constant dense<0.000000e+00> : vector<32x128xf32>
    %3 = tpu.matmul %0, %1, %cst {dimension_numbers = #tpu.dot_dimension_numbers<[1], [0], [0], [1], [0, 0, 1, 1], [], []>} : vector<32x128xf32>, vector<128x128xf32>, vector<32x128xf32> -> vector<32x128xf32>
    %4 = vector.broadcast %2 : vector<1x128xf32> to vector<32x128xf32>
    %5 = arith.addf %3, %4 : vector<32x128xf32>
    %cst_5 = arith.constant 0.000000e+00 : f32
    %6 = vector.broadcast %cst_5 : f32 to vector<32x128xf32>
    %7 = arith.maximumf %5, %6 : vector<32x128xf32>
    %c0_6 = arith.constant 0 : index
    %c0_7 = arith.constant 0 : index
    %8 = vector.load %arg4[%c0_6, %c0_7] : memref<128x128xf32, #tpu.memory_space<vmem>>, vector<128x128xf32>
    %c0_8 = arith.constant 0 : index
    %c0_9 = arith.constant 0 : index
    %9 = vector.load %arg5[%c0_8, %c0_9] : memref<1x128xf32, #tpu.memory_space<vmem>>, vector<1x128xf32>
    %cst_10 = arith.constant dense<0.000000e+00> : vector<32x128xf32>
    %10 = tpu.matmul %7, %8, %cst_10 {dimension_numbers = #tpu.dot_dimension_numbers<[1], [0], [0], [1], [0, 0, 1, 1], [], []>} : vector<32x128xf32>, vector<128x128xf32>, vector<32x128xf32> -> vector<32x128xf32>
    %11 = vector.broadcast %9 : vector<1x128xf32> to vector<32x128xf32>
    %12 = arith.addf %10, %11 : vector<32x128xf32>
    %cst_11 = arith.constant 0.000000e+00 : f32
    %13 = vector.broadcast %cst_11 : f32 to vector<32x128xf32>
    %14 = arith.maximumf %12, %13 : vector<32x128xf32>
    %c0_12 = arith.constant 0 : index
    %c0_13 = arith.constant 0 : index
    %15 = vector.load %arg6[%c0_12, %c0_13] : memref<128x128xf32, #tpu.memory_space<vmem>>, vector<128x128xf32>
    %c0_14 = arith.constant 0 : index
    %c0_15 = arith.constant 0 : index
    %16 = vector.load %arg7[%c0_14, %c0_15] : memref<1x128xf32, #tpu.memory_space<vmem>>, vector<1x128xf32>
    %cst_16 = arith.constant dense<0.000000e+00> : vector<32x128xf32>
    %17 = tpu.matmul %14, %15, %cst_16 {dimension_numbers = #tpu.dot_dimension_numbers<[1], [0], [0], [1], [0, 0, 1, 1], [], []>} : vector<32x128xf32>, vector<128x128xf32>, vector<32x128xf32> -> vector<32x128xf32>
    %18 = vector.broadcast %16 : vector<1x128xf32> to vector<32x128xf32>
    %19 = arith.addf %17, %18 : vector<32x128xf32>
    %cst_17 = arith.constant dense<0xFF800000> : vector<32xf32>
    %20 = vector.multi_reduction <maximumf>, %19, %cst_17 [1] : vector<32x128xf32> to vector<32xf32>
    %21 = vector.shape_cast %20 : vector<32xf32> to vector<32x1xf32>
    %22 = vector.broadcast %21 : vector<32x1xf32> to vector<32x128xf32>
    %23 = arith.subf %19, %22 : vector<32x128xf32>
    %c0_18 = arith.constant 0 : index
    %c0_19 = arith.constant 0 : index
    %24 = vector.load %arg8[%c0_18, %c0_19] : memref<32x128xf32, #tpu.memory_space<vmem>>, vector<32x128xf32>
    tpu.vector_store %arg8[%c0_18, %c0_19], %23 {strides = array<i32>} : memref<32x128xf32, #tpu.memory_space<vmem>>, vector<32x128xf32>,
    %25 = math.exp %23 : vector<32x128xf32>
    %cst_20 = arith.constant dense<0.000000e+00> : vector<32xf32>
    %26 = vector.multi_reduction <add>, %25, %cst_20 [1] : vector<32x128xf32> to vector<32xf32>
    %27 = vector.shape_cast %26 : vector<32xf32> to vector<32x1xf32>
    %28 = tpu.reciprocal %27 {approx = true} : vector<32x1xf32> -> vector<32x1xf32>
    %29 = vector.broadcast %28 : vector<32x1xf32> to vector<32x128xf32>
    %30 = arith.mulf %25, %29 : vector<32x128xf32>
    %c0_21 = arith.constant 0 : index
    %c0_22 = arith.constant 0 : index
    %31 = vector.load %arg9[%c0_21, %c0_22] : memref<32x128xf32, #tpu.memory_space<vmem>>, vector<32x128xf32>
    tpu.vector_store %arg9[%c0_21, %c0_22], %30 {strides = array<i32>} : memref<32x128xf32, #tpu.memory_space<vmem>>, vector<32x128xf32>,
    return
  }
  func.func @transform_0(%arg0: i32) -> (i32, i32) {
    %c0_i32 = arith.constant 0 : i32
    %c0_i32_0 = arith.constant 0 : i32
    return %arg0, %c0_i32 : i32, i32
  }
  func.func @transform_1(%arg0: i32) -> (i32, i32) {
    %c0_i32 = arith.constant 0 : i32
    %c0_i32_0 = arith.constant 0 : i32
    %c0_i32_1 = arith.constant 0 : i32
    return %c0_i32, %c0_i32_0 : i32, i32
  }
  func.func @transform_2(%arg0: i32) -> (i32, i32) {
    %c0_i32 = arith.constant 0 : i32
    %c0_i32_0 = arith.constant 0 : i32
    %c0_i32_1 = arith.constant 0 : i32
    return %c0_i32, %c0_i32_0 : i32, i32
  }
  func.func @transform_3(%arg0: i32) -> (i32, i32) {
    %c0_i32 = arith.constant 0 : i32
    %c0_i32_0 = arith.constant 0 : i32
    %c0_i32_1 = arith.constant 0 : i32
    return %c0_i32, %c0_i32_0 : i32, i32
  }
  func.func @transform_4(%arg0: i32) -> (i32, i32) {
    %c0_i32 = arith.constant 0 : i32
    %c0_i32_0 = arith.constant 0 : i32
    %c0_i32_1 = arith.constant 0 : i32
    return %c0_i32, %c0_i32_0 : i32, i32
  }
  func.func @transform_5(%arg0: i32) -> (i32, i32) {
    %c0_i32 = arith.constant 0 : i32
    %c0_i32_0 = arith.constant 0 : i32
    %c0_i32_1 = arith.constant 0 : i32
    return %c0_i32, %c0_i32_0 : i32, i32
  }
  func.func @transform_6(%arg0: i32) -> (i32, i32) {
    %c0_i32 = arith.constant 0 : i32
    %c0_i32_0 = arith.constant 0 : i32
    %c0_i32_1 = arith.constant 0 : i32
    return %c0_i32, %c0_i32_0 : i32, i32
  }
  func.func @transform_7(%arg0: i32) -> (i32, i32) {
    %c0_i32 = arith.constant 0 : i32
    %c0_i32_0 = arith.constant 0 : i32
    return %arg0, %c0_i32 : i32, i32
  }
  func.func @transform_8(%arg0: i32) -> (i32, i32) {
    %c0_i32 = arith.constant 0 : i32
    %c0_i32_0 = arith.constant 0 : i32
    return %arg0, %c0_i32 : i32, i32
  }
}

</mosaic_0001>

<llo_original>
// kernel: pt_deep_forward.1
$region0: #{pt_deep_forward.1}
  #allocation0 [shape = 'u32[]', space=smem, size = 0x4, offset = 0x4, fixed_abs, tag = 'smem constant byte address 0x4 - core index']
  #allocation1 [shape = 'u32[72,128]{1,0:T(1,128)}', space=vmem, size = 0x9000, scoped, tag = 'internal scratch']
  %s0 = inlined_call_operand.vmem [shape: f32[64,128], index: 0, kind: input, shape index: {}]
  %s1 = inlined_call_operand.vmem [shape: f32[128,128], index: 1, kind: input, shape index: {}]
  %s2 = inlined_call_operand.vmem [shape: f32[1,128], index: 2, kind: input, shape index: {}]
  %s3 = inlined_call_operand.vmem [shape: f32[128,128], index: 3, kind: input, shape index: {}]
  %s4 = inlined_call_operand.vmem [shape: f32[1,128], index: 4, kind: input, shape index: {}]
  %s5 = inlined_call_operand.vmem [shape: f32[128,128], index: 5, kind: input, shape index: {}]
  %s6 = inlined_call_operand.vmem [shape: f32[1,128], index: 6, kind: input, shape index: {}]
  %s7 = inlined_call_operand.vmem [shape: f32[64,128], index: 7, kind: output, shape index: {0}]
  %s8 = inlined_call_operand.vmem [shape: f32[64,128], index: 8, kind: output, shape index: {1}]
  %9 = xla_tuple %s7, %s8
  %s10 = sld [smem:[#allocation0]]
  $region69: #{pt_deep_forward.1} parent=0
    _
  %s12 = ssub.s32 1, %s10
  %s13 = scalar_select 0, %s12, %s10
  loop: start=0, step=1, limit=4
  $region2: #{pt_deep_forward.1} parent=0 // loop_pre_header
    _
  $region3: #{pt_deep_forward.1} parent=0 // loop_header
    %s15 = sphi 0, %s19
    %p16 = scmp.ge.s32.totalorder %s15, 4
    %s25 = sphi 0, %s27
    %s28 = sphi 0, %s25
    %s29 = sphi 0, %s28
    %s45 = sphi 0, %s29
    %s49 = sphi 0, %s49
    %s51 = sphi 0, %s49
    %s52 = sphi 0, %s51
    %s66 = sphi 0, %s52
    %s70 = sphi 0, %s70
    %s72 = sphi 0, %s70
    %s73 = sphi 0, %s72
    %s87 = sphi 0, %s73
    %s91 = sphi 0, %s91
    %s93 = sphi 0, %s91
    %s94 = sphi 0, %s93
    %s108 = sphi 0, %s94
    %s112 = sphi 0, %s112
    %s114 = sphi 0, %s112
    %s115 = sphi 0, %s114
    %s129 = sphi 0, %s115
    %s133 = sphi 0, %s133
    %s135 = sphi 0, %s133
    %s136 = sphi 0, %s135
    %s150 = sphi 0, %s136
    %s154 = sphi 0, %s154
    %s156 = sphi 0, %s154
    %s157 = sphi 0, %s156
    %s171 = sphi 0, %s157
    %s177 = sphi 0, %s179
    %s180 = sphi 0, %s177
    %s181 = sphi 0, %s180
    %s197 = sphi 0, %s181
    %s203 = sphi 0, %s205
    %s206 = sphi 0, %s203
    %s207 = sphi 0, %s206
    %s223 = sphi 0, %s207
  $region4: #{pt_deep_forward.1} parent=0 // loop_header_branch
    %18 = sbr.rel (%p16) target = $region8
  $region5: #{pt_deep_forward.1} parent=0 // loop_body
    %s20 = ssub.s32 %s15, 1
    %s21 = ssub.s32 %s15, 2
    %s22 = sadd.s32 %s15, 1
    %s23 = ssub.s32 %s15, %s22
    %p24 = scmp.eq.s32.totalorder %s23, 0
    %s26 = sadd.s32 %s25, 1
    %s27 = scalar_select %p24, %s25, %s26
    %p30 = pneg %p24
    %p31 = scmp.eq.s32.totalorder %s15, 1
    %p32 = por %p30, %p31
    %p33 = scmp.ne.s32.totalorder %s25, %s28
    %p34 = scmp.eq.s32.totalorder %s15, 0
    %p35 = por %p33, %p34
    %p36 = scmp.ne.s32.totalorder %s25, %s28
    %p37 = scmp.eq.s32.totalorder %s20, 1
    %p38 = por %p36, %p37
    %p39 = scmp.ne.s32.totalorder %s28, %s29
    %p40 = scmp.eq.s32.totalorder %s20, 0
    %p41 = por %p39, %p40
    %p42 = scmp.ne.s32.totalorder %s28, %s29
    %p43 = scmp.eq.s32.totalorder %s21, 1
    %p44 = por %p42, %p43
    %p46 = scmp.ne.s32.totalorder %s29, %s45
    %p47 = scmp.eq.s32.totalorder %s21, 0
    %p48 = por %p46, %p47
    %s50 = sadd.s32 %s49, 1
    %p53 = scmp.eq.s32.totalorder %s15, 1
    %p54 = scmp.ne.s32.totalorder %s49, %s51
    %p55 = scmp.eq.s32.totalorder %s15, 0
    %p56 = por %p54, %p55
    %p57 = scmp.ne.s32.totalorder %s49, %s51
    %p58 = scmp.eq.s32.totalorder %s20, 1
    %p59 = por %p57, %p58
    %p60 = scmp.ne.s32.totalorder %s51, %s52
    %p61 = scmp.eq.s32.totalorder %s20, 0
    %p62 = por %p60, %p61
    %p63 = scmp.ne.s32.totalorder %s51, %s52
    %p64 = scmp.eq.s32.totalorder %s21, 1
    %p65 = por %p63, %p64
    %p67 = scmp.ne.s32.totalorder %s52, %s66
    %p68 = scmp.eq.s32.totalorder %s21, 0
    %p69 = por %p67, %p68
    %s71 = sadd.s32 %s70, 1
    %p74 = scmp.eq.s32.totalorder %s15, 1
    %p75 = scmp.ne.s32.totalorder %s70, %s72
    %p76 = scmp.eq.s32.totalorder %s15, 0
    %p77 = por %p75, %p76
    %p78 = scmp.ne.s32.totalorder %s70, %s72
    %p79 = scmp.eq.s32.totalorder %s20, 1
    %p80 = por %p78, %p79
    %p81 = scmp.ne.s32.totalorder %s72, %s73
    %p82 = scmp.eq.s32.totalorder %s20, 0
    %p83 = por %p81, %p82
    %p84 = scmp.ne.s32.totalorder %s72, %s73
    %p85 = scmp.eq.s32.totalorder %s21, 1
    %p86 = por %p84, %p85
    %p88 = scmp.ne.s32.totalorder %s73, %s87
    %p89 = scmp.eq.s32.totalorder %s21, 0
    %p90 = por %p88, %p89
    %s92 = sadd.s32 %s91, 1
    %p95 = scmp.eq.s32.totalorder %s15, 1
    %p96 = scmp.ne.s32.totalorder %s91, %s93
    %p97 = scmp.eq.s32.totalorder %s15, 0
    %p98 = por %p96, %p97
    %p99 = scmp.ne.s32.totalorder %s91, %s93
    %p100 = scmp.eq.s32.totalorder %s20, 1
    %p101 = por %p99, %p100
    %p102 = scmp.ne.s32.totalorder %s93, %s94
    %p103 = scmp.eq.s32.totalorder %s20, 0
    %p104 = por %p102, %p103
    %p105 = scmp.ne.s32.totalorder %s93, %s94
    %p106 = scmp.eq.s32.totalorder %s21, 1
    %p107 = por %p105, %p106
    %p109 = scmp.ne.s32.totalorder %s94, %s108
    %p110 = scmp.eq.s32.totalorder %s21, 0
    %p111 = por %p109, %p110
    %s113 = sadd.s32 %s112, 1
    %p116 = scmp.eq.s32.totalorder %s15, 1
    %p117 = scmp.ne.s32.totalorder %s112, %s114
    %p118 = scmp.eq.s32.totalorder %s15, 0
    %p119 = por %p117, %p118
    %p120 = scmp.ne.s32.totalorder %s112, %s114
    %p121 = scmp.eq.s32.totalorder %s20, 1
    %p122 = por %p120, %p121
    %p123 = scmp.ne.s32.totalorder %s114, %s115
    %p124 = scmp.eq.s32.totalorder %s20, 0
    %p125 = por %p123, %p124
    %p126 = scmp.ne.s32.totalorder %s114, %s115
    %p127 = scmp.eq.s32.totalorder %s21, 1
    %p128 = por %p126, %p127
    %p130 = scmp.ne.s32.totalorder %s115, %s129
    %p131 = scmp.eq.s32.totalorder %s21, 0
    %p132 = por %p130, %p131
    %s134 = sadd.s32 %s133, 1
    %p137 = scmp.eq.s32.totalorder %s15, 1
    %p138 = scmp.ne.s32.totalorder %s133, %s135
    %p139 = scmp.eq.s32.totalorder %s15, 0
    %p140 = por %p138, %p139
    %p141 = scmp.ne.s32.totalorder %s133, %s135
    %p142 = scmp.eq.s32.totalorder %s20, 1
    %p143 = por %p141, %p142
    %p144 = scmp.ne.s32.totalorder %s135, %s136
    %p145 = scmp.eq.s32.totalorder %s20, 0
    %p146 = por %p144, %p145
    %p147 = scmp.ne.s32.totalorder %s135, %s136
    %p148 = scmp.eq.s32.totalorder %s21, 1
    %p149 = por %p147, %p148
    %p151 = scmp.ne.s32.totalorder %s136, %s150
    %p152 = scmp.eq.s32.totalorder %s21, 0
    %p153 = por %p151, %p152
    %s155 = sadd.s32 %s154, 1
    %p158 = scmp.eq.s32.totalorder %s15, 1
    %p159 = scmp.ne.s32.totalorder %s154, %s156
    %p160 = scmp.eq.s32.totalorder %s15, 0
    %p161 = por %p159, %p160
    %p162 = scmp.ne.s32.totalorder %s154, %s156
    %p163 = scmp.eq.s32.totalorder %s20, 1
    %p164 = por %p162, %p163
    %p165 = scmp.ne.s32.totalorder %s156, %s157
    %p166 = scmp.eq.s32.totalorder %s20, 0
    %p167 = por %p165, %p166
    %p168 = scmp.ne.s32.totalorder %s156, %s157
    %p169 = scmp.eq.s32.totalorder %s21, 1
    %p170 = por %p168, %p169
    %p172 = scmp.ne.s32.totalorder %s157, %s171
    %p173 = scmp.eq.s32.totalorder %s21, 0
    %p174 = por %p172, %p173
    %s175 = ssub.s32 %s15, %s22
    %p176 = scmp.eq.s32.totalorder %s175, 0
    %s178 = sadd.s32 %s177, 1
    %s179 = scalar_select %p176, %s177, %s178
    %p182 = pneg %p176
    %p183 = scmp.eq.s32.totalorder %s15, 1
    %p184 = por %p182, %p183
    %p185 = scmp.ne.s32.totalorder %s177, %s180
    %p186 = scmp.eq.s32.totalorder %s15, 0
    %p187 = por %p185, %p186
    %p188 = scmp.ne.s32.totalorder %s177, %s180
    %p189 = scmp.eq.s32.totalorder %s20, 1
    %p190 = por %p188, %p189
    %p191 = scmp.ne.s32.totalorder %s180, %s181
    %p192 = scmp.eq.s32.totalorder %s20, 0
    %p193 = por %p191, %p192
    %p194 = scmp.ne.s32.totalorder %s180, %s181
    %p195 = scmp.eq.s32.totalorder %s21, 1
    %p196 = por %p194, %p195
    %p198 = scmp.ne.s32.totalorder %s181, %s197
    %p199 = scmp.eq.s32.totalorder %s21, 0
    %p200 = por %p198, %p199
    %s201 = ssub.s32 %s15, %s22
    %p202 = scmp.eq.s32.totalorder %s201, 0
    %s204 = sadd.s32 %s203, 1
    %s205 = scalar_select %p202, %s203, %s204
    %p208 = pneg %p202
    %p209 = scmp.eq.s32.totalorder %s15, 1
    %p210 = por %p208, %p209
    %p211 = scmp.ne.s32.totalorder %s203, %s206
    %p212 = scmp.eq.s32.totalorder %s15, 0
    %p213 = por %p211, %p212
    %p214 = scmp.ne.s32.totalorder %s203, %s206
    %p215 = scmp.eq.s32.totalorder %s20, 1
    %p216 = por %p214, %p215
    %p217 = scmp.ne.s32.totalorder %s206, %s207
    %p218 = scmp.eq.s32.totalorder %s20, 0
    %p219 = por %p217, %p218
    %p220 = scmp.ne.s32.totalorder %s206, %s207
    %p221 = scmp.eq.s32.totalorder %s21, 1
    %p222 = por %p220, %p221
    %p224 = scmp.ne.s32.totalorder %s207, %s223
    %p225 = scmp.eq.s32.totalorder %s21, 0
    %p226 = por %p224, %p225
    %p227 = scmp.le.s32.totalorder 1, %s15
    %p228 = scmp.lt.s32.totalorder %s15, 3
    %p229 = pnand %p227, %p228
    %p230 = pneg %p229
    // Predicated region
    $region9: #{pt_deep_forward.1} parent=5 // pred_check
      _
    $region10: #{pt_deep_forward.1} parent=5 // pred_check_branch
      %232 = sbr.rel (%p229) target = $region12
    $region11: #{pt_deep_forward.1} parent=5 // pred_region
      %s233 = ssub.s32 %s15, 1
      // Predicated region
      $region13: #{pt_deep_forward.1} parent=11 // pred_check
        %p234 = pneg %p62
      $region14: #{pt_deep_forward.1} parent=11 // pred_check_branch
        %236 = sbr.rel (%p234) target = $region16
      $region15: #{pt_deep_forward.1} parent=11 // pred_region
        _
      $region16: #{pt_deep_forward.1} parent=11 // pred_fallthru
        _
      // Predicated region
      $region17: #{pt_deep_forward.1} parent=11 // pred_check
        %p237 = pneg %p83
      $region18: #{pt_deep_forward.1} parent=11 // pred_check_branch
        %239 = sbr.rel (%p237) target = $region20
      $region19: #{pt_deep_forward.1} parent=11 // pred_region
        _
      $region20: #{pt_deep_forward.1} parent=11 // pred_fallthru
        _
      // Predicated region
      $region21: #{pt_deep_forward.1} parent=11 // pred_check
        %p240 = pneg %p104
      $region22: #{pt_deep_forward.1} parent=11 // pred_check_branch
        %242 = sbr.rel (%p240) target = $region24
      $region23: #{pt_deep_forward.1} parent=11 // pred_region
        _
      $region24: #{pt_deep_forward.1} parent=11 // pred_fallthru
        _
      // Predicated region
      $region25: #{pt_deep_forward.1} parent=11 // pred_check
        %p243 = pneg %p125
      $region26: #{pt_deep_forward.1} parent=11 // pred_check_branch
        %245 = sbr.rel (%p243) target = $region28
      $region27: #{pt_deep_forward.1} parent=11 // pred_region
        _
      $region28: #{pt_deep_forward.1} parent=11 // pred_fallthru
        _
      // Predicated region
      $region29: #{pt_deep_forward.1} parent=11 // pred_check
        %p246 = pneg %p146
      $region30: #{pt_deep_forward.1} parent=11 // pred_check_branch
        %248 = sbr.rel (%p246) target = $region32
      $region31: #{pt_deep_forward.1} parent=11 // pred_region
        _
      $region32: #{pt_deep_forward.1} parent=11 // pred_fallthru
        _
      // Predicated region
      $region33: #{pt_deep_forward.1} parent=11 // pred_check
        %p249 = pneg %p167
      $region34: #{pt_deep_forward.1} parent=11 // pred_check_branch
        %251 = sbr.rel (%p249) target = $region36
      $region35: #{pt_deep_forward.1} parent=11 // pred_region
        _
      $region36: #{pt_deep_forward.1} parent=11 // pred_fallthru
        _
    $region12: #{pt_deep_forward.1} parent=5 // pred_fallthru
      _
    %p252 = scmp.lt.s32.totalorder %s15, 2
    // Predicated region
    $region37: #{pt_deep_forward.1} parent=5 // pred_check
      %p253 = pneg %p252
    $region38: #{pt_deep_forward.1} parent=5 // pred_check_branch
      %255 = sbr.rel (%p253) target = $region40
    $region39: #{pt_deep_forward.1} parent=5 // pred_region
      // Predicated region
      $region41: #{pt_deep_forward.1} parent=39 // pred_check
        %p256 = pneg %p35
      $region42: #{pt_deep_forward.1} parent=39 // pred_check_branch
        %258 = sbr.rel (%p256) target = $region44
      $region43: #{pt_deep_forward.1} parent=39 // pred_region
        %s259 = smul.u32 4, %s15
        %p260 = scmp.lt.s32.totalorder %s259, 7
        %s261 = scalar_select %p260, %s259, 7
        %s262 = smul.addr %s261, 8
        %s263 = scalar_lea.vmem %s0, %s262
        %s264 = smul.u32 4, %s15
      $region44: #{pt_deep_forward.1} parent=39 // pred_fallthru
        _
    $region40: #{pt_deep_forward.1} parent=5 // pred_fallthru
      _
    %p265 = scmp.le.s32.totalorder 1, %s15
    %p266 = scmp.lt.s32.totalorder %s15, 3
    %p267 = pnand %p265, %p266
    %p268 = pneg %p267
    // Predicated region
    $region45: #{pt_deep_forward.1} parent=5 // pred_check
      _
    $region46: #{pt_deep_forward.1} parent=5 // pred_check_branch
      %270 = sbr.rel (%p267) target = $region48
    $region47: #{pt_deep_forward.1} parent=5 // pred_region
      %s271 = ssub.s32 %s15, 1
      %s272 = smul.u32 4, %s20
      %p273 = scmp.lt.s32.totalorder %s272, 7
      %s274 = scalar_select %p273, %s272, 7
      %s275 = smul.addr %s274, 8
      %s276 = scalar_lea.vmem %s0, %s275
      %p277 = pneg %p41
      %p278 = pneg %p38
      %p279 = pneg %p62
      %p280 = pneg %p59
      %p281 = pneg %p83
      %p282 = pneg %p80
      %p283 = pneg %p104
      %p284 = pneg %p101
      %p285 = pneg %p125
      %p286 = pneg %p122
      %p287 = pneg %p146
      %p288 = pneg %p143
      %p289 = pneg %p167
      %p290 = pneg %p164
      %p291 = pneg %p193
      %p292 = pneg %p190
      %s293 = smul.u32 4, %s20
      %p294 = scmp.lt.s32.totalorder %s293, 7
      %s295 = scalar_select %p294, %s293, 7
      %s296 = smul.addr %s295, 8
      %s297 = scalar_lea.vmem %s7, %s296
      %p298 = pneg %p219
      %p299 = pneg %p216
      %s300 = smul.u32 4, %s20
      %p301 = scmp.lt.s32.totalorder %s300, 7
      %s302 = scalar_select %p301, %s300, 7
      %s303 = smul.addr %s302, 8
      %s304 = scalar_lea.vmem %s8, %s303
      %s305 = smul.u32 4, %s20
      %p306 = scmp.lt.s32.totalorder %s305, 7
      %s307 = scalar_select %p306, %s305, 7
      %s308 = smul.addr %s307, 8
      %s309 = scalar_lea.vmem %s0, %s308
      %s310 = smul.u32 4, %s20
      %s311 = smul.u32 4, %s20
      %p312 = scmp.lt.s32.totalorder %s311, 7
      %s313 = scalar_select %p312, %s311, 7
      %s314 = smul.addr %s313, 8
      %s315 = scalar_lea.vmem %s7, %s314
      %s316 = smul.u32 4, %s20
      %s317 = smul.u32 4, %s20
      %p318 = scmp.lt.s32.totalorder %s317, 7
      %s319 = scalar_select %p318, %s317, 7
      %s320 = smul.addr %s319, 8
      %s321 = scalar_lea.vmem %s8, %s320
      %s322 = smul.u32 4, %s20
      %v323 = vld [vmem:[%s309] sm:$0xff]
      %v324 = vld [vmem:[%s309 + $0x8] sm:$0xff]
      %v325 = vld [vmem:[%s309 + $0x10] sm:$0xff]
      %v326 = vld [vmem:[%s309 + $0x18] sm:$0xff]
      %v327 = vld [vmem:[%s1] sm:$0xff]
      %v328 = vld [vmem:[%s1 + $0x8] sm:$0xff]
      %v329 = vld [vmem:[%s1 + $0x10] sm:$0xff]
      %v330 = vld [vmem:[%s1 + $0x18] sm:$0xff]
      %v331 = vld [vmem:[%s1 + $0x20] sm:$0xff]
      %v332 = vld [vmem:[%s1 + $0x28] sm:$0xff]
      %v333 = vld [vmem:[%s1 + $0x30] sm:$0xff]
      %v334 = vld [vmem:[%s1 + $0x38] sm:$0xff]
      %v335 = vld [vmem:[%s1 + $0x40] sm:$0xff]
      %v336 = vld [vmem:[%s1 + $0x48] sm:$0xff]
      %v337 = vld [vmem:[%s1 + $0x50] sm:$0xff]
      %v338 = vld [vmem:[%s1 + $0x58] sm:$0xff]
      %v339 = vld [vmem:[%s1 + $0x60] sm:$0xff]
      %v340 = vld [vmem:[%s1 + $0x68] sm:$0xff]
      %v341 = vld [vmem:[%s1 + $0x70] sm:$0xff]
      %v342 = vld [vmem:[%s1 + $0x78] sm:$0xff]
      %v343 = vld [vmem:[%s2] sm:$0x1]
      %v345 = vperm.slane %v343, 0
      %347 = vmatpush.msra.mxu0 %v342
      %348 = vmatpush.msra.mxu0 %v341
      %349 = vmatpush.msra.mxu0 %v340
      %350 = vmatpush.msra.mxu0 %v339
      %351 = vmatpush.msra.mxu0 %v338
      %352 = vmatpush.msra.mxu0 %v337
      %353 = vmatpush.msra.mxu0 %v336
      %354 = vmatpush.msra.mxu0 %v335
      %355 = vmatpush.msra.mxu0 %v334
      %356 = vmatpush.msra.mxu0 %v333
      %357 = vmatpush.msra.mxu0 %v332
      %358 = vmatpush.msra.mxu0 %v331
      %359 = vmatpush.msra.mxu0 %v330
      %360 = vmatpush.msra.mxu0 %v329
      %361 = vmatpush.msra.mxu0 %v328
      %362 = vmatpush.msra.mxu0 %v327
      %363 = vmatmul.f32.gmra.mxu0 %v323
      %v364 = vpop.f32.mrf.mxu0
      %v365 = vadd.f32 %v345, %v364
      %366 = vmatmul.f32.gmra.mxu0 %v324
      %v367 = vpop.f32.mrf.mxu0
      %v368 = vadd.f32 %v345, %v367
      %369 = vmatmul.f32.gmra.mxu0 %v325
      %v370 = vpop.f32.mrf.mxu0
      %v371 = vadd.f32 %v345, %v370
      %372 = vmatmul.f32.gmra.mxu0 %v326
      %v373 = vpop.f32.mrf.mxu0
      %v374 = vadd.f32 %v345, %v373
      %375 = vdwg.mxu0
      %v376 = vmax.f32 %v365, 0.0
      %v377 = vmax.f32 %v368, 0.0
      %v378 = vmax.f32 %v371, 0.0
      %v379 = vmax.f32 %v374, 0.0
      %v380 = vld [vmem:[%s3] sm:$0xff]
      %v381 = vld [vmem:[%s3 + $0x8] sm:$0xff]
      %v382 = vld [vmem:[%s3 + $0x10] sm:$0xff]
      %v383 = vld [vmem:[%s3 + $0x18] sm:$0xff]
      %v384 = vld [vmem:[%s3 + $0x20] sm:$0xff]
      %v385 = vld [vmem:[%s3 + $0x28] sm:$0xff]
      %v386 = vld [vmem:[%s3 + $0x30] sm:$0xff]
      %v387 = vld [vmem:[%s3 + $0x38] sm:$0xff]
      %v388 = vld [vmem:[%s3 + $0x40] sm:$0xff]
      %v389 = vld [vmem:[%s3 + $0x48] sm:$0xff]
      %v390 = vld [vmem:[%s3 + $0x50] sm:$0xff]
      %v391 = vld [vmem:[%s3 + $0x58] sm:$0xff]
      %v392 = vld [vmem:[%s3 + $0x60] sm:$0xff]
      %v393 = vld [vmem:[%s3 + $0x68] sm:$0xff]
      %v394 = vld [vmem:[%s3 + $0x70] sm:$0xff]
      %v395 = vld [vmem:[%s3 + $0x78] sm:$0xff]
      %v396 = vld [vmem:[%s4] sm:$0x1]
      %v398 = vperm.slane %v396, 0
      %400 = vmatpush.msra.mxu0 %v395
      %401 = vmatpush.msra.mxu0 %v394
      %402 = vmatpush.msra.mxu0 %v393
      %403 = vmatpush.msra.mxu0 %v392
      %404 = vmatpush.msra.mxu0 %v391
      %405 = vmatpush.msra.mxu0 %v390
      %406 = vmatpush.msra.mxu0 %v389
      %407 = vmatpush.msra.mxu0 %v388
      %408 = vmatpush.msra.mxu0 %v387
      %409 = vmatpush.msra.mxu0 %v386
      %410 = vmatpush.msra.mxu0 %v385
      %411 = vmatpush.msra.mxu0 %v384
      %412 = vmatpush.msra.mxu0 %v383
      %413 = vmatpush.msra.mxu0 %v382
      %414 = vmatpush.msra.mxu0 %v381
      %415 = vmatpush.msra.mxu0 %v380
      %416 = vmatmul.f32.gmra.mxu0 %v376
      %v417 = vpop.f32.mrf.mxu0
      %v418 = vadd.f32 %v398, %v417
      %419 = vmatmul.f32.gmra.mxu0 %v377
      %v420 = vpop.f32.mrf.mxu0
      %v421 = vadd.f32 %v398, %v420
      %422 = vmatmul.f32.gmra.mxu0 %v378
      %v423 = vpop.f32.mrf.mxu0
      %v424 = vadd.f32 %v398, %v423
      %425 = vmatmul.f32.gmra.mxu0 %v379
      %v426 = vpop.f32.mrf.mxu0
      %v427 = vadd.f32 %v398, %v426
      %428 = vdwg.mxu0
      %v429 = vmax.f32 %v418, 0.0
      %v430 = vmax.f32 %v421, 0.0
      %v431 = vmax.f32 %v424, 0.0
      %v432 = vmax.f32 %v427, 0.0
      %v433 = vld [vmem:[%s5] sm:$0xff]
      %v434 = vld [vmem:[%s5 + $0x8] sm:$0xff]
      %v435 = vld [vmem:[%s5 + $0x10] sm:$0xff]
      %v436 = vld [vmem:[%s5 + $0x18] sm:$0xff]
      %v437 = vld [vmem:[%s5 + $0x20] sm:$0xff]
      %v438 = vld [vmem:[%s5 + $0x28] sm:$0xff]
      %v439 = vld [vmem:[%s5 + $0x30] sm:$0xff]
      %v440 = vld [vmem:[%s5 + $0x38] sm:$0xff]
      %v441 = vld [vmem:[%s5 + $0x40] sm:$0xff]
      %v442 = vld [vmem:[%s5 + $0x48] sm:$0xff]
      %v443 = vld [vmem:[%s5 + $0x50] sm:$0xff]
      %v444 = vld [vmem:[%s5 + $0x58] sm:$0xff]
      %v445 = vld [vmem:[%s5 + $0x60] sm:$0xff]
      %v446 = vld [vmem:[%s5 + $0x68] sm:$0xff]
      %v447 = vld [vmem:[%s5 + $0x70] sm:$0xff]
      %v448 = vld [vmem:[%s5 + $0x78] sm:$0xff]
      %v449 = vld [vmem:[%s6] sm:$0x1]
      %v451 = vperm.slane %v449, 0
      %453 = vmatpush.msra.mxu0 %v448
      %454 = vmatpush.msra.mxu0 %v447
      %455 = vmatpush.msra.mxu0 %v446
      %456 = vmatpush.msra.mxu0 %v445
      %457 = vmatpush.msra.mxu0 %v444
      %458 = vmatpush.msra.mxu0 %v443
      %459 = vmatpush.msra.mxu0 %v442
      %460 = vmatpush.msra.mxu0 %v441
      %461 = vmatpush.msra.mxu0 %v440
      %462 = vmatpush.msra.mxu0 %v439
      %463 = vmatpush.msra.mxu0 %v438
      %464 = vmatpush.msra.mxu0 %v437
      %465 = vmatpush.msra.mxu0 %v436
      %466 = vmatpush.msra.mxu0 %v435
      %467 = vmatpush.msra.mxu0 %v434
      %468 = vmatpush.msra.mxu0 %v433
      %469 = vmatmul.f32.gmra.mxu0 %v429
      %v470 = vpop.f32.mrf.mxu0
      %v471 = vadd.f32 %v451, %v470
      %472 = vmatmul.f32.gmra.mxu0 %v430
      %v473 = vpop.f32.mrf.mxu0
      %v474 = vadd.f32 %v451, %v473
      %475 = vmatmul.f32.gmra.mxu0 %v431
      %v476 = vpop.f32.mrf.mxu0
      %v477 = vadd.f32 %v451, %v476
      %478 = vmatmul.f32.gmra.mxu0 %v432
      %v479 = vpop.f32.mrf.mxu0
      %v480 = vadd.f32 %v451, %v479
      %481 = vdwg.mxu0
      %482 = vmax.xlane.f32.xlu0 %v471
      %v483 = vpop.xlane.xlu0 %482
      %484 = vmax.xlane.f32.xlu0 %v474
      %v485 = vpop.xlane.xlu0 %484
      %486 = vmax.xlane.f32.xlu0 %v477
      %v487 = vpop.xlane.xlu0 %486
      %488 = vmax.xlane.f32.xlu0 %v480
      %v489 = vpop.xlane.xlu0 %488
      %v490 = vsub.f32 %v471, %v483
      %v491 = vsub.f32 %v474, %v485
      %v492 = vsub.f32 %v477, %v487
      %v493 = vsub.f32 %v480, %v489
      %494 = vst [vmem:[%s315] sm:$0xff] %v490
      %495 = vst [vmem:[%s315 + $0x8] sm:$0xff] %v491
      %496 = vst [vmem:[%s315 + $0x10] sm:$0xff] %v492
      %497 = vst [vmem:[%s315 + $0x18] sm:$0xff] %v493
      %v498 = vmul.f32 %v490, 1.442695
      %v499 = vpow.pop %v498
      %v500 = vmul.f32 %v491, 1.442695
      %v501 = vpow.pop %v500
      %v502 = vmul.f32 %v492, 1.442695
      %v503 = vpow.pop %v502
      %v504 = vmul.f32 %v493, 1.442695
      %v505 = vpow.pop %v504
      %506 = vadd.xlane.f32.xlu0 %v499
      %v507 = vpop.xlane.xlu0 %506
      %508 = vadd.xlane.f32.xlu0 %v501
      %v509 = vpop.xlane.xlu0 %508
      %510 = vadd.xlane.f32.xlu0 %v503
      %v511 = vpop.xlane.xlu0 %510
      %512 = vadd.xlane.f32.xlu0 %v505
      %v513 = vpop.xlane.xlu0 %512
      %v514 = vrcp.pop %v507
      %v515 = vrcp.pop %v509
      %v516 = vrcp.pop %v511
      %v517 = vrcp.pop %v513
      %v518 = vmul.f32 %v499, %v514
      %v519 = vmul.f32 %v501, %v515
      %v520 = vmul.f32 %v503, %v516
      %v521 = vmul.f32 %v505, %v517
      %522 = vst [vmem:[%s321] sm:$0xff] %v518
      %523 = vst [vmem:[%s321 + $0x8] sm:$0xff] %v519
      %524 = vst [vmem:[%s321 + $0x10] sm:$0xff] %v520
      %525 = vst [vmem:[%s321 + $0x18] sm:$0xff] %v521
      %s526 = smul.u32 4, %s20
      %p527 = scmp.lt.s32.totalorder %s526, 7
      %s528 = scalar_select %p527, %s526, 7
      %s529 = smul.addr %s528, 8
      %s530 = scalar_lea.vmem %s7, %s529
      %s531 = smul.u32 4, %s20
      %p532 = scmp.lt.s32.totalorder %s531, 7
      %s533 = scalar_select %p532, %s531, 7
      %s534 = smul.addr %s533, 8
      %s535 = scalar_lea.vmem %s8, %s534
      // Predicated region
      $region49: #{pt_deep_forward.1} parent=47 // pred_check
        %p536 = pneg %p190
      $region50: #{pt_deep_forward.1} parent=47 // pred_check_branch
        %538 = sbr.rel (%p536) target = $region52
      $region51: #{pt_deep_forward.1} parent=47 // pred_region
        %s539 = smul.u32 4, %s20
      $region52: #{pt_deep_forward.1} parent=47 // pred_fallthru
        _
      // Predicated region
      $region53: #{pt_deep_forward.1} parent=47 // pred_check
        %p540 = pneg %p216
      $region54: #{pt_deep_forward.1} parent=47 // pred_check_branch
        %542 = sbr.rel (%p540) target = $region56
      $region55: #{pt_deep_forward.1} parent=47 // pred_region
        %s543 = smul.u32 4, %s20
      $region56: #{pt_deep_forward.1} parent=47 // pred_fallthru
        _
    $region48: #{pt_deep_forward.1} parent=5 // pred_fallthru
      _
    %p544 = scmp.le.s32.totalorder 2, %s15
    // Predicated region
    $region57: #{pt_deep_forward.1} parent=5 // pred_check
      %p545 = pneg %p544
    $region58: #{pt_deep_forward.1} parent=5 // pred_check_branch
      %547 = sbr.rel (%p545) target = $region60
    $region59: #{pt_deep_forward.1} parent=5 // pred_region
      %s548 = ssub.s32 %s15, 2
      // Predicated region
      $region61: #{pt_deep_forward.1} parent=59 // pred_check
        %p549 = pneg %p196
      $region62: #{pt_deep_forward.1} parent=59 // pred_check_branch
        %551 = sbr.rel (%p549) target = $region64
      $region63: #{pt_deep_forward.1} parent=59 // pred_region
        %s552 = smul.u32 4, %s21
        %p553 = scmp.lt.s32.totalorder %s552, 7
        %s554 = scalar_select %p553, %s552, 7
        %s555 = smul.addr %s554, 8
        %s556 = scalar_lea.vmem %s7, %s555
      $region64: #{pt_deep_forward.1} parent=59 // pred_fallthru
        _
      // Predicated region
      $region65: #{pt_deep_forward.1} parent=59 // pred_check
        %p557 = pneg %p222
      $region66: #{pt_deep_forward.1} parent=59 // pred_check_branch
        %559 = sbr.rel (%p557) target = $region68
      $region67: #{pt_deep_forward.1} parent=59 // pred_region
        %s560 = smul.u32 4, %s21
        %p561 = scmp.lt.s32.totalorder %s560, 7
        %s562 = scalar_select %p561, %s560, 7
        %s563 = smul.addr %s562, 8
        %s564 = scalar_lea.vmem %s8, %s563
      $region68: #{pt_deep_forward.1} parent=59 // pred_fallthru
        _
    $region60: #{pt_deep_forward.1} parent=5 // pred_fallthru
      _
  $region6: #{pt_deep_forward.1} parent=0 // loop_footer
    %s19 = sadd.s32 1, %s15
  $region7: #{pt_deep_forward.1} parent=0 // loop_footer_branch
    %14 = sbr.rel target = $region3
  $region8: #{pt_deep_forward.1} parent=0 // loop_exit
    _

</llo_original>
